<compile_context>
chip_gen: v5e
topology: v5e:2x2
jax: 0.10.0
libtpu: 0.0.40
codegen_flags: <defaults>
</compile_context>

<pallas_src>
import jax
import jax.numpy as jnp
from jax.experimental import pallas as pl
from jax.experimental.pallas import tpu as pltpu


def _round_up(x, m):
    return (x + m - 1) // m * m


def _cdiv(a, b):
    return (a + b - 1) // b


# ----------------------------- kernel -----------------------------

def mlp_kernel(x_ref, w1_ref, w_ref, b_ref, o_ref):
    # L1: x @ W1 + b1, ReLU  (contraction over the real, un-padded input lanes)
    h = jnp.maximum(
        jnp.dot(x_ref[...], w1_ref[...], preferred_element_type=jnp.float32)
        + b_ref[0:1, :], 0.0)
    # L2+L3 folded (BN1, b2, BN2 already folded): h @ W23 + b23, ReLU
    h = jnp.maximum(
        jnp.dot(h, w_ref[0], preferred_element_type=jnp.float32) + b_ref[1:2, :], 0.0)
    # L4 (BN3 folded): h @ W4 + b4, ReLU
    h = jnp.maximum(
        jnp.dot(h, w_ref[1], preferred_element_type=jnp.float32) + b_ref[2:3, :], 0.0)
    # L5+L6 folded (BN4 folded): h @ W56 + b56   (no ReLU, lane-dense output slab)
    o_ref[...] = (
        jnp.dot(h, w_ref[2], preferred_element_type=jnp.float32) + b_ref[3:4, :])


# ----------------------------- wrapper -----------------------------

def pack_params(folded_params, n_inputs, n_outputs):
    """One-time packing: fold the L2/L3 and L5/L6 pairs and build persistent slabs."""
    (W1, b1, W2f, W3f, b3f, W4f, b4f, W5f, b5f, W6, b6) = folded_params

    # Fold adjacent linear pairs (no nonlinearity in between).
    W23 = W2f @ W3f                      # (h1, h2)
    b23 = b3f                            # b2 already folded forward into b3f
    W56 = W5f @ W6                       # (h2, n_out)
    b56 = b5f @ W6 + b6

    h1 = W1.shape[1]
    h2 = W23.shape[1]
    F = _round_up(max(h1, h2, n_outputs, 128), 128)   # lane-padded hidden width
    n_in_p = _round_up(n_inputs, 8)                   # sublane-aligned input width

    # W1 kept separate at its real contraction depth (no 8x lane-padding of x).
    w1_pad = jnp.zeros((n_in_p, F), jnp.float32).at[:n_inputs, :h1].set(W1)

    def pad_w(W):
        return jnp.zeros((F, F), jnp.float32).at[: W.shape[0], : W.shape[1]].set(W)

    w_slab = jnp.stack([pad_w(W23), pad_w(W4f), pad_w(W56)])   # (3, F, F)

    b_slab = jnp.zeros((8, F), jnp.float32)                     # (8, F) sublane-aligned
    for i, b in enumerate((b1, b23, b4f, b56)):
        b_slab = b_slab.at[i, : b.shape[-1]].set(b.reshape(-1))

    return dict(w1=w1_pad, w_slab=w_slab, b_slab=b_slab,
                n_in_p=n_in_p, F=F, n_outputs=n_outputs)


def model_forward(x, packed, *, batch_tile=1024):
    """Runs the full folded MLP in one Pallas kernel. `packed` comes from pack_params()."""
    w1, w_slab, b_slab = packed["w1"], packed["w_slab"], packed["b_slab"]
    n_in_p, F, n_outputs = packed["n_in_p"], packed["F"], packed["n_outputs"]

    batch, n_inputs = x.shape

    # Batch tile: big enough to amortize per-step overhead, but split so the
    # "parallel" axis gets >= 2 steps when possible (v7x: both TensorCores busy).
    tb = max(8, min(batch_tile, _round_up(_cdiv(batch, 2), 8)))
    bp = _round_up(batch, tb)

    # Pad only what is needed per call: batch rows to bp, features to n_in_p.
    if bp != batch or n_in_p != n_inputs:
        xp = jnp.zeros((bp, n_in_p), jnp.float32).at[:batch, :n_inputs].set(x)
    else:
        xp = x

    grid = (bp // tb,)
    flops = 2 * bp * (n_in_p * F + 3 * F * F)
    bytes_accessed = 4 * (bp * n_in_p            # x in
                          + n_in_p * F           # W1 (once)
                          + 3 * F * F            # weight slab (once)
                          + 8 * F                # bias slab (once)
                          + bp * F)              # output slab

    out = pl.pallas_call(
        mlp_kernel,
        out_shape=jax.ShapeDtypeStruct((bp, F), jnp.float32),
        grid=grid,
        in_specs=[
            # activations: tiled over batch, last dim = full array dim (no 128-pad)
            pl.BlockSpec((tb, n_in_p), lambda i: (i, 0)),
            # W1 / weight slab / bias slab: grid-invariant -> DMA'd once, VMEM-resident
            pl.BlockSpec((n_in_p, F), lambda i: (0, 0)),
            pl.BlockSpec((3, F, F), lambda i: (0, 0, 0)),
            pl.BlockSpec((8, F), lambda i: (0, 0)),
        ],
        out_specs=pl.BlockSpec((tb, F), lambda i: (i, 0)),       # lane-dense output
        compiler_params=pltpu.CompilerParams(
            dimension_semantics=("parallel",)),
        cost_estimate=pl.CostEstimate(
            flops=flops, transcendentals=0, bytes_accessed=bytes_accessed),
    )(xp, w1, w_slab, b_slab)

    return out[:batch, :n_outputs]


# ------------------- parameter construction / folding -------------------

def make_linear(key, fin, fout):
    kw, kb = jax.random.split(key)
    bound = 1.0 / jnp.sqrt(jnp.float32(fin))
    w = jax.random.uniform(kw, (fin, fout), jnp.float32, -bound, bound)  # pre-transposed
    b = jax.random.uniform(kb, (fout,), jnp.float32, -bound, bound)
    return w, b


def make_bn_affine(key, feat, eps=1e-5):
    kg, kb, km, kv = jax.random.split(key, 4)
    gamma = jax.random.uniform(kg, (feat,), jnp.float32, 0.5, 1.5)
    beta = 0.1 * jax.random.normal(kb, (feat,), jnp.float32)
    r_mean = 0.1 * jax.random.normal(km, (feat,), jnp.float32)
    r_var = jax.random.uniform(kv, (feat,), jnp.float32, 0.5, 1.5)
    scale = gamma / jnp.sqrt(r_var + eps)      # eval-mode BN -> affine
    shift = beta - r_mean * scale
    return scale, shift


def init_raw_params(key, n_inputs, h1, h2, n_outputs):
    keys = jax.random.split(key, 10)
    W1, b1 = make_linear(keys[0], n_inputs, h1)
    s1, t1 = make_bn_affine(keys[1], h1)
    W2, b2 = make_linear(keys[2], h1, h1)
    s2, t2 = make_bn_affine(keys[3], h1)
    W3, b3 = make_linear(keys[4], h1, h2)
    s3, t3 = make_bn_affine(keys[5], h2)
    W4, b4 = make_linear(keys[6], h2, h2)
    s4, t4 = make_bn_affine(keys[7], h2)
    W5, b5 = make_linear(keys[8], h2, h1)
    W6, b6 = make_linear(keys[9], h1, n_outputs)
    return dict(W1=W1, b1=b1, s1=s1, t1=t1, W2=W2, b2=b2, s2=s2, t2=t2,
                W3=W3, b3=b3, s3=s3, t3=t3, W4=W4, b4=b4, s4=s4, t4=t4,
                W5=W5, b5=b5, W6=W6, b6=b6)


def fold_params(p):
    """Fold eval-mode BN affines (and the non-ReLU-guarded b2) into adjacent Linears."""
    # BN1 (after ReLU) -> Linear2
    W2f = p["s1"][:, None] * p["W2"]
    b2f = p["b2"] + p["t1"] @ p["W2"]
    # BN2 (no ReLU before) + b2f -> Linear3
    c2 = b2f * p["s2"] + p["t2"]
    W3f = p["s2"][:, None] * p["W3"]
    b3f = p["b3"] + c2 @ p["W3"]
    # BN3 (after ReLU) -> Linear4
    W4f = p["s3"][:, None] * p["W4"]
    b4f = p["b4"] + p["t3"] @ p["W4"]
    # BN4 (after ReLU) -> Linear5
    W5f = p["s4"][:, None] * p["W5"]
    b5f = p["b5"] + p["t4"] @ p["W5"]
    return (p["W1"], p["b1"], W2f, W3f, b3f, W4f, b4f, W5f, b5f, p["W6"], p["b6"])


def reference_forward(x, p):
    """Unfolded eval-mode reference matching the PyTorch module exactly."""
    h = jnp.maximum(x @ p["W1"] + p["b1"], 0.0)
    h = h * p["s1"] + p["t1"]
    h = h @ p["W2"] + p["b2"]
    h = h * p["s2"] + p["t2"]               # Dropout(0.2) is identity in eval
    h = jnp.maximum(h @ p["W3"] + p["b3"], 0.0)
    h = h * p["s3"] + p["t3"]
    h = jnp.maximum(h @ p["W4"] + p["b4"], 0.0)
    h = h * p["s4"] + p["t4"]               # Dropout(0.2) is identity in eval
    h = h @ p["W5"] + p["b5"]
    return h @ p["W6"] + p["b6"]


if __name__ == "__main__":
    batch = 8
    n_inputs, hidden_units_1, hidden_units_2, n_outputs = 16, 32, 16, 2

    key = jax.random.PRNGKey(0)
    kx, kp = jax.random.split(key)
    x = jax.random.normal(kx, (batch, n_inputs), jnp.float32)

    raw = init_raw_params(kp, n_inputs, hidden_units_1, hidden_units_2, n_outputs)
    folded = fold_params(raw)
    packed = pack_params(folded, n_inputs, n_outputs)   # one-time: fold pairs + pack slabs

    out = model_forward(x, packed)
    out = jax.block_until_ready(out)

    ref = reference_forward(x, raw)
    assert out.shape == (batch, n_outputs)
    assert jnp.allclose(out, ref, atol=1e-4, rtol=1e-4), "mismatch vs JAX reference"

    print("KERNEL_OK")
</pallas_src>

<mosaic_0001>
module attributes {stable_mosaic.version = 11 : i64} {
  func.func @mlp_kernel(%arg0: i32, %arg1: memref<8x16xf32, #tpu.memory_space<vmem>>, %arg2: memref<16x128xf32, #tpu.memory_space<vmem>>, %arg3: memref<3x128x128xf32, #tpu.memory_space<vmem>>, %arg4: memref<8x128xf32, #tpu.memory_space<vmem>>, %arg5: memref<8x128xf32, #tpu.memory_space<vmem>>) attributes {dimension_semantics = [#tpu.dimension_semantics<parallel>], iteration_bounds = array<i64: 1>, scalar_prefetch = 0 : i64, scratch_operands = 0 : i64, tpu.core_type = #tpu.core_type<tc>, window_params = [{transform_indices = @transform_0, window_bounds = array<i64: 8, 16>}, {pipeline_mode = #tpu.pipeline_mode<synchronous>, transform_indices = @transform_1, window_bounds = array<i64: 16, 128>}, {pipeline_mode = #tpu.pipeline_mode<synchronous>, transform_indices = @transform_2, window_bounds = array<i64: 3, 128, 128>}, {pipeline_mode = #tpu.pipeline_mode<synchronous>, transform_indices = @transform_3, window_bounds = array<i64: 8, 128>}, {transform_indices = @transform_4, window_bounds = array<i64: 8, 128>}]} {
    %c0 = arith.constant 0 : index
    %c0_0 = arith.constant 0 : index
    %0 = vector.load %arg1[%c0, %c0_0] : memref<8x16xf32, #tpu.memory_space<vmem>>, vector<8x16xf32>
    %c0_1 = arith.constant 0 : index
    %c0_2 = arith.constant 0 : index
    %1 = vector.load %arg2[%c0_1, %c0_2] : memref<16x128xf32, #tpu.memory_space<vmem>>, vector<16x128xf32>
    %cst = arith.constant dense<0.000000e+00> : vector<8x128xf32>
    %2 = tpu.matmul %0, %1, %cst {dimension_numbers = #tpu.dot_dimension_numbers<[1], [0], [0], [1], [0, 0, 1, 1], [], []>} : vector<8x16xf32>, vector<16x128xf32>, vector<8x128xf32> -> vector<8x128xf32>
    %c0_3 = arith.constant 0 : index
    %c0_4 = arith.constant 0 : index
    %3 = vector.load %arg4[%c0_3, %c0_4] : memref<8x128xf32, #tpu.memory_space<vmem>>, vector<1x128xf32>
    %4 = vector.broadcast %3 : vector<1x128xf32> to vector<8x128xf32>
    %5 = arith.addf %2, %4 : vector<8x128xf32>
    %cst_5 = arith.constant 0.000000e+00 : f32
    %6 = vector.broadcast %cst_5 : f32 to vector<8x128xf32>
    %7 = arith.maximumf %5, %6 : vector<8x128xf32>
    %c0_6 = arith.constant 0 : index
    %c0_7 = arith.constant 0 : index
    %c0_8 = arith.constant 0 : index
    %8 = vector.load %arg3[%c0_6, %c0_7, %c0_8] : memref<3x128x128xf32, #tpu.memory_space<vmem>>, vector<1x128x128xf32>
    %9 = vector.shape_cast %8 : vector<1x128x128xf32> to vector<128x128xf32>
    %cst_9 = arith.constant dense<0.000000e+00> : vector<8x128xf32>
    %10 = tpu.matmul %7, %9, %cst_9 {dimension_numbers = #tpu.dot_dimension_numbers<[1], [0], [0], [1], [0, 0, 1, 1], [], []>} : vector<8x128xf32>, vector<128x128xf32>, vector<8x128xf32> -> vector<8x128xf32>
    %c1 = arith.constant 1 : index
    %c0_10 = arith.constant 0 : index
    %11 = vector.load %arg4[%c1, %c0_10] : memref<8x128xf32, #tpu.memory_space<vmem>>, vector<1x128xf32>
    %12 = vector.broadcast %11 : vector<1x128xf32> to vector<8x128xf32>
    %13 = arith.addf %10, %12 : vector<8x128xf32>
    %cst_11 = arith.constant 0.000000e+00 : f32
    %14 = vector.broadcast %cst_11 : f32 to vector<8x128xf32>
    %15 = arith.maximumf %13, %14 : vector<8x128xf32>
    %c1_12 = arith.constant 1 : index
    %c0_13 = arith.constant 0 : index
    %c0_14 = arith.constant 0 : index
    %16 = vector.load %arg3[%c1_12, %c0_13, %c0_14] : memref<3x128x128xf32, #tpu.memory_space<vmem>>, vector<1x128x128xf32>
    %17 = vector.shape_cast %16 : vector<1x128x128xf32> to vector<128x128xf32>
    %cst_15 = arith.constant dense<0.000000e+00> : vector<8x128xf32>
    %18 = tpu.matmul %15, %17, %cst_15 {dimension_numbers = #tpu.dot_dimension_numbers<[1], [0], [0], [1], [0, 0, 1, 1], [], []>} : vector<8x128xf32>, vector<128x128xf32>, vector<8x128xf32> -> vector<8x128xf32>
    %c2 = arith.constant 2 : index
    %c0_16 = arith.constant 0 : index
    %19 = vector.load %arg4[%c2, %c0_16] : memref<8x128xf32, #tpu.memory_space<vmem>>, vector<1x128xf32>
    %20 = vector.broadcast %19 : vector<1x128xf32> to vector<8x128xf32>
    %21 = arith.addf %18, %20 : vector<8x128xf32>
    %cst_17 = arith.constant 0.000000e+00 : f32
    %22 = vector.broadcast %cst_17 : f32 to vector<8x128xf32>
    %23 = arith.maximumf %21, %22 : vector<8x128xf32>
    %c2_18 = arith.constant 2 : index
    %c0_19 = arith.constant 0 : index
    %c0_20 = arith.constant 0 : index
    %24 = vector.load %arg3[%c2_18, %c0_19, %c0_20] : memref<3x128x128xf32, #tpu.memory_space<vmem>>, vector<1x128x128xf32>
    %25 = vector.shape_cast %24 : vector<1x128x128xf32> to vector<128x128xf32>
    %cst_21 = arith.constant dense<0.000000e+00> : vector<8x128xf32>
    %26 = tpu.matmul %23, %25, %cst_21 {dimension_numbers = #tpu.dot_dimension_numbers<[1], [0], [0], [1], [0, 0, 1, 1], [], []>} : vector<8x128xf32>, vector<128x128xf32>, vector<8x128xf32> -> vector<8x128xf32>
    %c3 = arith.constant 3 : index
    %c0_22 = arith.constant 0 : index
    %27 = vector.load %arg4[%c3, %c0_22] : memref<8x128xf32, #tpu.memory_space<vmem>>, vector<1x128xf32>
    %28 = vector.broadcast %27 : vector<1x128xf32> to vector<8x128xf32>
    %29 = arith.addf %26, %28 : vector<8x128xf32>
    %c0_23 = arith.constant 0 : index
    %c0_24 = arith.constant 0 : index
    %30 = vector.load %arg5[%c0_23, %c0_24] : memref<8x128xf32, #tpu.memory_space<vmem>>, vector<8x128xf32>
    tpu.vector_store %arg5[%c0_23, %c0_24], %29 {strides = array<i32>} : memref<8x128xf32, #tpu.memory_space<vmem>>, vector<8x128xf32>,
    return
  }
  func.func @transform_0(%arg0: i32) -> (i32, i32) {
    %c0_i32 = arith.constant 0 : i32
    %c0_i32_0 = arith.constant 0 : i32
    return %arg0, %c0_i32 : i32, i32
  }
  func.func @transform_1(%arg0: i32) -> (i32, i32) {
    %c0_i32 = arith.constant 0 : i32
    %c0_i32_0 = arith.constant 0 : i32
    %c0_i32_1 = arith.constant 0 : i32
    return %c0_i32, %c0_i32_0 : i32, i32
  }
  func.func @transform_2(%arg0: i32) -> (i32, i32, i32) {
    %c0_i32 = arith.constant 0 : i32
    %c0_i32_0 = arith.constant 0 : i32
    %c0_i32_1 = arith.constant 0 : i32
    %c0_i32_2 = arith.constant 0 : i32
    return %c0_i32, %c0_i32_0, %c0_i32_1 : i32, i32, i32
  }
  func.func @transform_3(%arg0: i32) -> (i32, i32) {
    %c0_i32 = arith.constant 0 : i32
    %c0_i32_0 = arith.constant 0 : i32
    %c0_i32_1 = arith.constant 0 : i32
    return %c0_i32, %c0_i32_0 : i32, i32
  }
  func.func @transform_4(%arg0: i32) -> (i32, i32) {
    %c0_i32 = arith.constant 0 : i32
    %c0_i32_0 = arith.constant 0 : i32
    return %arg0, %c0_i32 : i32, i32
  }
}

</mosaic_0001>

<llo_original>
// kernel: tpu_custom_call.1
$region0: #{tpu_custom_call.1}
  #allocation0 [shape = 'u32[]', space=smem, size = 0x4, offset = 0x4, fixed_abs, tag = 'smem constant byte address 0x4 - core index']
  #allocation1 [shape = 'u32[72,128]{1,0:T(1,128)}', space=vmem, size = 0x9000, scoped, tag = 'internal scratch']
  %s0 = inlined_call_operand.hbm [shape: f32[8,16], index: 0, kind: input, shape index: {}]
  %s1 = inlined_call_operand.hbm [shape: f32[16,128], index: 1, kind: input, shape index: {}]
  %s2 = inlined_call_operand.hbm [shape: f32[3,128,128], index: 2, kind: input, shape index: {}]
  %s3 = inlined_call_operand.hbm [shape: f32[8,128], index: 3, kind: input, shape index: {}]
  %s4 = inlined_call_operand.hbm [shape: f32[8,128], index: 4, kind: output, shape index: {}]
  %s5 = sld [smem:[#allocation0]]
  $region42: #{tpu_custom_call.1} parent=0
    _
  %s7 = ssub.s32 1, %s5
  %s8 = scalar_select 0, %s7, %s5
  $region1: #{tpu_custom_call.1} parent=0
    #allocation2 [shape = 'u8[4096]{0}', space=vmem, size = 0x1000, scoped, tag = 'input window, operand 0, single buffered']
    #allocation3 [shape = 's32[1]{0}', space=sflag, size = 0x4, scoped, tag = 'scoped memory for tpu_custom_call.1']
    #allocation4 [shape = 's32[1]{0}', space=sflag, size = 0x4, scoped, tag = 'scoped memory for tpu_custom_call.1']
    #allocation5 [shape = 'u8[8192]{0}', space=vmem, size = 0x2000, scoped, tag = 'input window, operand 1, single buffered']
    #allocation6 [shape = 's32[1]{0}', space=sflag, size = 0x4, scoped, tag = 'scoped memory for tpu_custom_call.1']
    #allocation7 [shape = 'u8[196608]{0}', space=vmem, size = 0x30000, scoped, tag = 'input window, operand 2, single buffered']
    #allocation8 [shape = 'u8[4096]{0}', space=vmem, size = 0x1000, scoped, tag = 'input window, operand 3, single buffered']
    #allocation9 [shape = 's32[1]{0}', space=sflag, size = 0x4, scoped, tag = 'scoped memory for tpu_custom_call.1']
    #allocation10 [shape = 'u8[4096]{0}', space=vmem, size = 0x1000, scoped, tag = 'output window, operand 0, single buffered']
    %9 = vsyncpa [#allocation3], 0
    %10 = vsyncpa [#allocation6], 0
    %11 = vsyncpa [#allocation9], 0
    %12 = vsyncpa [#allocation4], 0
    // Predicated region
    $region2: #{tpu_custom_call.1} parent=1 // pred_check
      _
    $region3: #{tpu_custom_call.1} parent=1 // pred_check_branch
      %14 = sbr.rel (0) target = $region5
    $region4: #{tpu_custom_call.1} parent=1 // pred_region
      %16 = vsyncadd [#allocation3], 0
      %s18 = sshll.u32 %s0, 4
      %s19 = int_to_ptr.hbm [resolvable:$true] %s18
      %s20 = sshll.u32 [#allocation2], 4
      %s21 = int_to_ptr.vmem [resolvable:$true] %s20
      %23 = dma.hbm_to_vmem [thread:$0]  %s19, 128, %s21, [#allocation3]
    $region5: #{tpu_custom_call.1} parent=1 // pred_fallthru
      _
    // Predicated region
    $region6: #{tpu_custom_call.1} parent=1 // pred_check
      _
    $region7: #{tpu_custom_call.1} parent=1 // pred_check_branch
      %25 = sbr.rel (0) target = $region9
    $region8: #{tpu_custom_call.1} parent=1 // pred_region
      %27 = vsyncadd [#allocation6], 0
      %s28 = sshll.u32 %s1, 4
      %s29 = int_to_ptr.hbm [resolvable:$true] %s28
      %s30 = sshll.u32 [#allocation5], 4
      %s31 = int_to_ptr.vmem [resolvable:$true] %s30
      %36 = dma.hbm_to_vmem [thread:$0]  %s29, 256, %s31, [#allocation6], 128, 128, 8
    $region9: #{tpu_custom_call.1} parent=1 // pred_fallthru
      _
    // Predicated region
    $region10: #{tpu_custom_call.1} parent=1 // pred_check
      _
    $region11: #{tpu_custom_call.1} parent=1 // pred_check_branch
      %38 = sbr.rel (0) target = $region13
    $region12: #{tpu_custom_call.1} parent=1 // pred_region
      %40 = vsyncadd [#allocation6], 0
      %s41 = sshll.u32 %s2, 4
      %s42 = int_to_ptr.hbm [resolvable:$true] %s41
      %s43 = sshll.u32 [#allocation7], 4
      %s44 = int_to_ptr.vmem [resolvable:$true] %s43
      %49 = dma.hbm_to_vmem [thread:$0]  %s42, 6144, %s44, [#allocation6], 128, 128, 8
    $region13: #{tpu_custom_call.1} parent=1 // pred_fallthru
      _
    // Predicated region
    $region14: #{tpu_custom_call.1} parent=1 // pred_check
      _
    $region15: #{tpu_custom_call.1} parent=1 // pred_check_branch
      %51 = sbr.rel (0) target = $region17
    $region16: #{tpu_custom_call.1} parent=1 // pred_region
      %53 = vsyncadd [#allocation9], 0
      %s55 = sshll.u32 %s3, 4
      %s56 = int_to_ptr.hbm [resolvable:$true] %s55
      %s57 = sshll.u32 [#allocation8], 4
      %s58 = int_to_ptr.vmem [resolvable:$true] %s57
      %60 = dma.hbm_to_vmem [thread:$0]  %s56, 128, %s58, [#allocation9]
    $region17: #{tpu_custom_call.1} parent=1 // pred_fallthru
      _
    // Predicated region
    $region18: #{tpu_custom_call.1} parent=1 // pred_check
      _
    $region19: #{tpu_custom_call.1} parent=1 // pred_check_branch
      %62 = sbr.rel (0) target = $region21
    $region20: #{tpu_custom_call.1} parent=1 // pred_region
      %64 = dma.done [#allocation3], 128
    $region21: #{tpu_custom_call.1} parent=1 // pred_fallthru
      _
    // Predicated region
    $region22: #{tpu_custom_call.1} parent=1 // pred_check
      _
    $region23: #{tpu_custom_call.1} parent=1 // pred_check_branch
      %66 = sbr.rel (0) target = $region25
    $region24: #{tpu_custom_call.1} parent=1 // pred_region
      %68 = dma.done [#allocation6], 256
    $region25: #{tpu_custom_call.1} parent=1 // pred_fallthru
      _
    // Predicated region
    $region26: #{tpu_custom_call.1} parent=1 // pred_check
      _
    $region27: #{tpu_custom_call.1} parent=1 // pred_check_branch
      %70 = sbr.rel (0) target = $region29
    $region28: #{tpu_custom_call.1} parent=1 // pred_region
      %72 = dma.done [#allocation6], 6144
    $region29: #{tpu_custom_call.1} parent=1 // pred_fallthru
      _
    // Predicated region
    $region30: #{tpu_custom_call.1} parent=1 // pred_check
      _
    $region31: #{tpu_custom_call.1} parent=1 // pred_check_branch
      %74 = sbr.rel (0) target = $region33
    $region32: #{tpu_custom_call.1} parent=1 // pred_region
      %76 = dma.done [#allocation9], 128
    $region33: #{tpu_custom_call.1} parent=1 // pred_fallthru
      _
    %v77 = vld [vmem:[#allocation2] sm:$0xff]
    %v78 = vld [vmem:[#allocation5] sm:$0xff]
    %v79 = vld [vmem:[#allocation5 + $0x8] sm:$0xff]
    %v80 = vld [vmem:[#allocation8] sm:$0x1]
    %v81 = vperm.slane %v80, 0
    %vm82 = vcmask 130048
    %v84 = vsel %vm82, %v77, 0
    %86 = vmatpush.msra.mxu0 0.0
    %87 = vmatpush.msra.mxu0 0.0
    %88 = vmatpush.msra.mxu0 0.0
    %89 = vmatpush.msra.mxu0 0.0
    %90 = vmatpush.msra.mxu0 0.0
    %91 = vmatpush.msra.mxu0 0.0
    %92 = vmatpush.msra.mxu0 0.0
    %93 = vmatpush.msra.mxu0 0.0
    %94 = vmatpush.msra.mxu0 0.0
    %95 = vmatpush.msra.mxu0 0.0
    %96 = vmatpush.msra.mxu0 0.0
    %97 = vmatpush.msra.mxu0 0.0
    %98 = vmatpush.msra.mxu0 0.0
    %99 = vmatpush.msra.mxu0 0.0
    %100 = vmatpush.msra.mxu0 %v79
    %101 = vmatpush.msra.mxu0 %v78
    %102 = vmatmul.f32.gmra.mxu0 %v84
    %v103 = vpop.f32.mrf.mxu0
    %v104 = vadd.f32 %v81, %v103
    %105 = vdwg.mxu0
    %v106 = vmax.f32 %v104, 0.0
    %v107 = vld [vmem:[#allocation7] sm:$0xff]
    %v108 = vld [vmem:[#allocation7 + $0x8] sm:$0xff]
    %v109 = vld [vmem:[#allocation7 + $0x10] sm:$0xff]
    %v110 = vld [vmem:[#allocation7 + $0x18] sm:$0xff]
    %v111 = vld [vmem:[#allocation7 + $0x20] sm:$0xff]
    %v112 = vld [vmem:[#allocation7 + $0x28] sm:$0xff]
    %v113 = vld [vmem:[#allocation7 + $0x30] sm:$0xff]
    %v114 = vld [vmem:[#allocation7 + $0x38] sm:$0xff]
    %v115 = vld [vmem:[#allocation7 + $0x40] sm:$0xff]
    %v116 = vld [vmem:[#allocation7 + $0x48] sm:$0xff]
    %v117 = vld [vmem:[#allocation7 + $0x50] sm:$0xff]
    %v118 = vld [vmem:[#allocation7 + $0x58] sm:$0xff]
    %v119 = vld [vmem:[#allocation7 + $0x60] sm:$0xff]
    %v120 = vld [vmem:[#allocation7 + $0x68] sm:$0xff]
    %v121 = vld [vmem:[#allocation7 + $0x70] sm:$0xff]
    %v122 = vld [vmem:[#allocation7 + $0x78] sm:$0xff]
    %v123 = vld [vmem:[#allocation8 + $0x1] sm:$0x1]
    %v124 = vperm.slane %v123, 0
    %125 = vmatpush.msra.mxu0 %v122
    %126 = vmatpush.msra.mxu0 %v121
    %127 = vmatpush.msra.mxu0 %v120
    %128 = vmatpush.msra.mxu0 %v119
    %129 = vmatpush.msra.mxu0 %v118
    %130 = vmatpush.msra.mxu0 %v117
    %131 = vmatpush.msra.mxu0 %v116
    %132 = vmatpush.msra.mxu0 %v115
    %133 = vmatpush.msra.mxu0 %v114
    %134 = vmatpush.msra.mxu0 %v113
    %135 = vmatpush.msra.mxu0 %v112
    %136 = vmatpush.msra.mxu0 %v111
    %137 = vmatpush.msra.mxu0 %v110
    %138 = vmatpush.msra.mxu0 %v109
    %139 = vmatpush.msra.mxu0 %v108
    %140 = vmatpush.msra.mxu0 %v107
    %141 = vmatmul.f32.gmra.mxu0 %v106
    %v142 = vpop.f32.mrf.mxu0
    %v143 = vadd.f32 %v124, %v142
    %144 = vdwg.mxu0
    %v145 = vmax.f32 %v143, 0.0
    %s146 = scalar_lea.vmem [#allocation7], 128
    %v147 = vld [vmem:[%s146] sm:$0xff]
    %v148 = vld [vmem:[%s146 + $0x8] sm:$0xff]
    %v149 = vld [vmem:[%s146 + $0x10] sm:$0xff]
    %v150 = vld [vmem:[%s146 + $0x18] sm:$0xff]
    %v151 = vld [vmem:[%s146 + $0x20] sm:$0xff]
    %v152 = vld [vmem:[%s146 + $0x28] sm:$0xff]
    %v153 = vld [vmem:[%s146 + $0x30] sm:$0xff]
    %v154 = vld [vmem:[%s146 + $0x38] sm:$0xff]
    %v155 = vld [vmem:[%s146 + $0x40] sm:$0xff]
    %v156 = vld [vmem:[%s146 + $0x48] sm:$0xff]
    %v157 = vld [vmem:[%s146 + $0x50] sm:$0xff]
    %v158 = vld [vmem:[%s146 + $0x58] sm:$0xff]
    %v159 = vld [vmem:[%s146 + $0x60] sm:$0xff]
    %v160 = vld [vmem:[%s146 + $0x68] sm:$0xff]
    %v161 = vld [vmem:[%s146 + $0x70] sm:$0xff]
    %v162 = vld [vmem:[%s146 + $0x78] sm:$0xff]
    %v163 = vld [vmem:[#allocation8 + $0x2] sm:$0x1]
    %v164 = vperm.slane %v163, 0
    %165 = vmatpush.msra.mxu0 %v162
    %166 = vmatpush.msra.mxu0 %v161
    %167 = vmatpush.msra.mxu0 %v160
    %168 = vmatpush.msra.mxu0 %v159
    %169 = vmatpush.msra.mxu0 %v158
    %170 = vmatpush.msra.mxu0 %v157
    %171 = vmatpush.msra.mxu0 %v156
    %172 = vmatpush.msra.mxu0 %v155
    %173 = vmatpush.msra.mxu0 %v154
    %174 = vmatpush.msra.mxu0 %v153
    %175 = vmatpush.msra.mxu0 %v152
    %176 = vmatpush.msra.mxu0 %v151
    %177 = vmatpush.msra.mxu0 %v150
    %178 = vmatpush.msra.mxu0 %v149
    %179 = vmatpush.msra.mxu0 %v148
    %180 = vmatpush.msra.mxu0 %v147
    %181 = vmatmul.f32.gmra.mxu0 %v145
    %v182 = vpop.f32.mrf.mxu0
    %v183 = vadd.f32 %v164, %v182
    %184 = vdwg.mxu0
    %v185 = vmax.f32 %v183, 0.0
    %s186 = scalar_lea.vmem [#allocation7], 256
    %v187 = vld [vmem:[%s186] sm:$0xff]
    %v188 = vld [vmem:[%s186 + $0x8] sm:$0xff]
    %v189 = vld [vmem:[%s186 + $0x10] sm:$0xff]
    %v190 = vld [vmem:[%s186 + $0x18] sm:$0xff]
    %v191 = vld [vmem:[%s186 + $0x20] sm:$0xff]
    %v192 = vld [vmem:[%s186 + $0x28] sm:$0xff]
    %v193 = vld [vmem:[%s186 + $0x30] sm:$0xff]
    %v194 = vld [vmem:[%s186 + $0x38] sm:$0xff]
    %v195 = vld [vmem:[%s186 + $0x40] sm:$0xff]
    %v196 = vld [vmem:[%s186 + $0x48] sm:$0xff]
    %v197 = vld [vmem:[%s186 + $0x50] sm:$0xff]
    %v198 = vld [vmem:[%s186 + $0x58] sm:$0xff]
    %v199 = vld [vmem:[%s186 + $0x60] sm:$0xff]
    %v200 = vld [vmem:[%s186 + $0x68] sm:$0xff]
    %v201 = vld [vmem:[%s186 + $0x70] sm:$0xff]
    %v202 = vld [vmem:[%s186 + $0x78] sm:$0xff]
    %v203 = vld [vmem:[#allocation8 + $0x3] sm:$0x1]
    %v204 = vperm.slane %v203, 0
    %205 = vmatpush.msra.mxu0 %v202
    %206 = vmatpush.msra.mxu0 %v201
    %207 = vmatpush.msra.mxu0 %v200
    %208 = vmatpush.msra.mxu0 %v199
    %209 = vmatpush.msra.mxu0 %v198
    %210 = vmatpush.msra.mxu0 %v197
    %211 = vmatpush.msra.mxu0 %v196
    %212 = vmatpush.msra.mxu0 %v195
    %213 = vmatpush.msra.mxu0 %v194
    %214 = vmatpush.msra.mxu0 %v193
    %215 = vmatpush.msra.mxu0 %v192
    %216 = vmatpush.msra.mxu0 %v191
    %217 = vmatpush.msra.mxu0 %v190
    %218 = vmatpush.msra.mxu0 %v189
    %219 = vmatpush.msra.mxu0 %v188
    %220 = vmatpush.msra.mxu0 %v187
    %221 = vmatmul.f32.gmra.mxu0 %v185
    %v222 = vpop.f32.mrf.mxu0
    %v223 = vadd.f32 %v204, %v222
    %224 = vdwg.mxu0
    %225 = vst [vmem:[#allocation10] sm:$0xff] %v223
    // Predicated region
    $region34: #{tpu_custom_call.1} parent=1 // pred_check
      _
    $region35: #{tpu_custom_call.1} parent=1 // pred_check_branch
      %227 = sbr.rel (0) target = $region37
    $region36: #{tpu_custom_call.1} parent=1 // pred_region
      %229 = vsyncadd [#allocation4], 0
      %s231 = sshll.u32 [#allocation10], 4
      %s232 = int_to_ptr.vmem [resolvable:$true] %s231
      %s233 = sshll.u32 %s4, 4
      %s234 = int_to_ptr.hbm [resolvable:$true] %s233
      %236 = dma.vmem_to_hbm [thread:$0]  %s232, 128, %s234, [#allocation4]
    $region37: #{tpu_custom_call.1} parent=1 // pred_fallthru
      _
    // Predicated region
    $region38: #{tpu_custom_call.1} parent=1 // pred_check
      _
    $region39: #{tpu_custom_call.1} parent=1 // pred_check_branch
      %238 = sbr.rel (0) target = $region41
    $region40: #{tpu_custom_call.1} parent=1 // pred_region
      %240 = dma.done [#allocation4], 128
    $region41: #{tpu_custom_call.1} parent=1 // pred_fallthru
      _
    %241 = vsyncpa [#allocation3], 1
    %242 = vsyncpa [#allocation6], 1
    %243 = vsyncpa [#allocation9], 1
    %244 = vsyncpa [#allocation4], 1

</llo_original>
